<compile_context>
chip_gen: v7x
topology: tpu7x:2x2x1
jax: 0.10.0
libtpu: 0.0.40
codegen_flags: <defaults>
</compile_context>

<pallas_src>
import functools

import jax
import jax.numpy as jnp
from jax.experimental import pallas as pl
from jax.experimental.pallas import tpu as pltpu


# ----------------------------------------------------------------------------
# Fused Pallas kernel: gather -> MLP(relu) -> MLP(relu) -> vocoder(tanh)
# One grid step processes a (tile_m, ...) slab of the flattened B*T token rows.
# ----------------------------------------------------------------------------
def _tts_fused_kernel(tok_ref, emb_ref, w1_ref, b1_ref, w2_ref, b2_ref,
                      wv_ref, bv_ref, o_ref, *, vocab):
    tile_m = tok_ref.shape[0]
    tok = tok_ref[...]                                            # (tile_m, 1) int32

    # In-kernel embedding lookup as a one-hot matmul.  Kept in f32 so embedding
    # values stay exact; at VOCAB=128 this is a single 128^3 MXU matmul and is
    # negligible next to the bf16 layers below.  Intermediates never touch HBM.
    col = jax.lax.broadcasted_iota(jnp.int32, (tile_m, vocab), 1)  # (tile_m, V)
    onehot = (col == tok).astype(jnp.float32)                      # (tile_m, V)
    x = jnp.dot(onehot, emb_ref[...], preferred_element_type=jnp.float32)

    # Encoder MLP + vocoder head: bf16 operands on the MXU, f32 accumulation;
    # bias / relu / tanh stay in f32 (no bf16 VPU/EUP on v5e).
    h = jnp.dot(x.astype(jnp.bfloat16), w1_ref[...],
                preferred_element_type=jnp.float32) + b1_ref[...]
    h = jnp.maximum(h, 0.0)
    h = jnp.dot(h.astype(jnp.bfloat16), w2_ref[...],
                preferred_element_type=jnp.float32) + b2_ref[...]
    h = jnp.maximum(h, 0.0)
    y = jnp.dot(h.astype(jnp.bfloat16), wv_ref[...],
                preferred_element_type=jnp.float32) + bv_ref[...]

    # Lane-dense (tile_m, 128) tile is the only HBM writeback.
    o_ref[...] = jnp.tanh(y).astype(o_ref.dtype)


def tts_fused_forward(tokens, emb, w1, b1, w2, b2, wv, bv, *, tile_m=128):
    """Batched fused forward: (B*T,) int32 token ids -> (B*T, S) f32 frames."""
    m = tokens.shape[0]
    assert m % tile_m == 0, "flattened batch*seq must be a multiple of tile_m"
    vocab, _hidden = emb.shape
    samples = wv.shape[1]
    tok2d = tokens.reshape(m, 1).astype(jnp.int32)

    # Weights/biases use a constant index_map -> stay resident in VMEM across
    # all M tiles (no re-DMA); only the token slab and output tile move per step.
    resident = lambda shape: pl.BlockSpec(shape, lambda i: (0, 0))

    return pl.pallas_call(
        functools.partial(_tts_fused_kernel, vocab=vocab),
        out_shape=jax.ShapeDtypeStruct((m, samples), jnp.float32),
        grid=(m // tile_m,),
        in_specs=[
            pl.BlockSpec((tile_m, 1), lambda i: (i, 0)),   # token ids per tile
            resident(emb.shape),
            resident(w1.shape), resident(b1.shape),
            resident(w2.shape), resident(b2.shape),
            resident(wv.shape), resident(bv.shape),
        ],
        out_specs=pl.BlockSpec((tile_m, samples), lambda i: (i, 0)),
        compiler_params=pltpu.CompilerParams(
            dimension_semantics=("parallel",),          # v7x: one tile per TC
            vmem_limit_bytes=32 * 1024 * 1024),
    )(tok2d, emb, w1, b1, w2, b2, wv, bv)


# ----------------------------------------------------------------------------
# Synthetic "StyleTTS2"-like model: deterministic parameters built in-script.
# ----------------------------------------------------------------------------
class TTSPallas:
    VOCAB = 128               # character vocabulary size (lane-dense)
    HIDDEN = 128              # encoder hidden width (full 128-lane vregs)
    SAMPLES_PER_TOKEN = 128   # waveform samples per token (lane-dense output)
    SEQ_LEN = 8               # fixed token count per utterance
    BATCH = 32                # utterances fused per call -> M = 256 matmul rows

    def __init__(self):
        key = jax.random.PRNGKey(0)
        k_emb, k_w1, k_w2, k_wv = jax.random.split(key, 4)
        V, H, S = self.VOCAB, self.HIDDEN, self.SAMPLES_PER_TOKEN
        scale = 0.1
        # Embedding stays f32 (exact gather values); matmul weights are bf16.
        self.embedding = scale * jax.random.normal(k_emb, (V, H), jnp.float32)
        self.w1 = (scale * jax.random.normal(k_w1, (H, H), jnp.float32)
                   ).astype(jnp.bfloat16)
        self.b1 = jnp.zeros((1, H), jnp.float32)
        self.w2 = (scale * jax.random.normal(k_w2, (H, H), jnp.float32)
                   ).astype(jnp.bfloat16)
        self.b2 = jnp.zeros((1, H), jnp.float32)
        self.w_voc = (scale * jax.random.normal(k_wv, (H, S), jnp.float32)
                      ).astype(jnp.bfloat16)
        self.b_voc = jnp.zeros((1, S), jnp.float32)

        # jit the whole device-side forward: one executable launch per call.
        self._forward = jax.jit(self._device_forward)

        # Warm-up passes mirroring the reference module's __init__ loop (also
        # populates the jit/compile cache so later calls are dispatch-only).
        for _ in range(3):
            jax.block_until_ready(self("warming up!"))

    # glue: host-side char tokenizer (string handling has no device analogue)
    def tokenize_batch(self, texts):
        if isinstance(texts, str):
            texts = [texts]
        texts = list(texts)[: self.BATCH]
        texts = texts + [""] * (self.BATCH - len(texts))   # pad to fixed batch
        rows = []
        for t in texts:
            ids = [ord(c) % self.VOCAB for c in t][: self.SEQ_LEN]
            ids = ids + [0] * (self.SEQ_LEN - len(ids))
            rows.append(ids)
        return jnp.asarray(rows, dtype=jnp.int32)           # (B, T)

    def _device_forward(self, tokens_bt):
        tokens = tokens_bt.reshape(-1)                       # (B*T,)
        frames = tts_fused_forward(tokens, self.embedding,
                                   self.w1, self.b1,
                                   self.w2, self.b2,
                                   self.w_voc, self.b_voc)   # (B*T, S)
        return frames.reshape(self.BATCH,
                              self.SEQ_LEN * self.SAMPLES_PER_TOKEN)

    def __call__(self, texts):
        """Single string (reference semantics) or a batch of strings."""
        single = isinstance(texts, str)
        wavs = self._forward(self.tokenize_batch(texts))
        return wavs[0] if single else wavs


if __name__ == "__main__":
    model = TTSPallas()

    # Batched synthesis: 32 utterances x 8 tokens -> M = 256 MXU rows, grid=(2,).
    texts = [f"hello tpu utterance {i}" for i in range(TTSPallas.BATCH)]
    wavs = jax.block_until_ready(model(texts))
    assert wavs.shape == (TTSPallas.BATCH,
                          TTSPallas.SEQ_LEN * TTSPallas.SAMPLES_PER_TOKEN)
    assert wavs.dtype == jnp.float32
    assert bool(jnp.all(jnp.isfinite(wavs)))

    # Pure-JAX reference (same bf16 matmul casts) for numerical sanity.
    tok = model.tokenize_batch(texts).reshape(-1)
    x_ref = jnp.take(model.embedding, tok, axis=0)
    h_ref = jnp.maximum(jnp.dot(x_ref.astype(jnp.bfloat16), model.w1,
                                preferred_element_type=jnp.float32)
                        + model.b1, 0.0)
    h_ref = jnp.maximum(jnp.dot(h_ref.astype(jnp.bfloat16), model.w2,
                                preferred_element_type=jnp.float32)
                        + model.b2, 0.0)
    y_ref = jnp.tanh(jnp.dot(h_ref.astype(jnp.bfloat16), model.w_voc,
                             preferred_element_type=jnp.float32)
                     + model.b_voc)
    assert bool(jnp.allclose(wavs, y_ref.reshape(wavs.shape),
                             atol=5e-2, rtol=0.0))

    # Single-string call keeps the reference module's forward(text) semantics.
    wav_one = jax.block_until_ready(model("hello tpu"))
    assert wav_one.shape == (TTSPallas.SEQ_LEN * TTSPallas.SAMPLES_PER_TOKEN,)
    assert bool(jnp.all(jnp.isfinite(wav_one)))

    print("KERNEL_OK")
</pallas_src>

<mosaic_0001>
module attributes {stable_mosaic.version = 11 : i64} {
  func.func @_tts_fused_kernel(%arg0: i32, %arg1: memref<128x1xi32, #tpu.memory_space<vmem>>, %arg2: memref<128x128xf32, #tpu.memory_space<vmem>>, %arg3: memref<128x128xbf16, #tpu.memory_space<vmem>>, %arg4: memref<1x128xf32, #tpu.memory_space<vmem>>, %arg5: memref<128x128xbf16, #tpu.memory_space<vmem>>, %arg6: memref<1x128xf32, #tpu.memory_space<vmem>>, %arg7: memref<128x128xbf16, #tpu.memory_space<vmem>>, %arg8: memref<1x128xf32, #tpu.memory_space<vmem>>, %arg9: memref<128x128xf32, #tpu.memory_space<vmem>>) attributes {dimension_semantics = [#tpu.dimension_semantics<parallel>], iteration_bounds = array<i64: 2>, scalar_prefetch = 0 : i64, scratch_operands = 0 : i64, tpu.core_type = #tpu.core_type<tc>, window_params = [{transform_indices = @transform_0, window_bounds = array<i64: 128, 1>}, {pipeline_mode = #tpu.pipeline_mode<synchronous>, transform_indices = @transform_1, window_bounds = array<i64: 128, 128>}, {pipeline_mode = #tpu.pipeline_mode<synchronous>, transform_indices = @transform_2, window_bounds = array<i64: 128, 128>}, {pipeline_mode = #tpu.pipeline_mode<synchronous>, transform_indices = @transform_3, window_bounds = array<i64: 1, 128>}, {pipeline_mode = #tpu.pipeline_mode<synchronous>, transform_indices = @transform_4, window_bounds = array<i64: 128, 128>}, {pipeline_mode = #tpu.pipeline_mode<synchronous>, transform_indices = @transform_5, window_bounds = array<i64: 1, 128>}, {pipeline_mode = #tpu.pipeline_mode<synchronous>, transform_indices = @transform_6, window_bounds = array<i64: 128, 128>}, {pipeline_mode = #tpu.pipeline_mode<synchronous>, transform_indices = @transform_7, window_bounds = array<i64: 1, 128>}, {transform_indices = @transform_8, window_bounds = array<i64: 128, 128>}]} {
    %c0 = arith.constant 0 : index
    %c0_0 = arith.constant 0 : index
    %0 = vector.load %arg1[%c0, %c0_0] : memref<128x1xi32, #tpu.memory_space<vmem>>, vector<128x1xi32>
    %1 = tpu.iota {dimensions = array<i32: 1>} : vector<128x128xi32>
    %2 = vector.broadcast %0 : vector<128x1xi32> to vector<128x128xi32>
    %3 = arith.cmpi eq, %1, %2 : vector<128x128xi32>
    %4 = arith.extui %3 : vector<128x128xi1> to vector<128x128xi32>
    %5 = arith.sitofp %4 : vector<128x128xi32> to vector<128x128xf32>
    %c0_1 = arith.constant 0 : index
    %c0_2 = arith.constant 0 : index
    %6 = vector.load %arg2[%c0_1, %c0_2] : memref<128x128xf32, #tpu.memory_space<vmem>>, vector<128x128xf32>
    %cst = arith.constant dense<0.000000e+00> : vector<128x128xf32>
    %7 = tpu.matmul %5, %6, %cst {dimension_numbers = #tpu.dot_dimension_numbers<[1], [0], [0], [1], [0, 0, 1, 1], [], []>} : vector<128x128xf32>, vector<128x128xf32>, vector<128x128xf32> -> vector<128x128xf32>
    %8 = arith.truncf %7 : vector<128x128xf32> to vector<128x128xbf16>
    %c0_3 = arith.constant 0 : index
    %c0_4 = arith.constant 0 : index
    %9 = vector.load %arg3[%c0_3, %c0_4] : memref<128x128xbf16, #tpu.memory_space<vmem>>, vector<128x128xbf16>
    %cst_5 = arith.constant dense<0.000000e+00> : vector<128x128xf32>
    %10 = tpu.matmul %8, %9, %cst_5 {dimension_numbers = #tpu.dot_dimension_numbers<[1], [0], [0], [1], [0, 0, 1, 1], [], []>} : vector<128x128xbf16>, vector<128x128xbf16>, vector<128x128xf32> -> vector<128x128xf32>
    %c0_6 = arith.constant 0 : index
    %c0_7 = arith.constant 0 : index
    %11 = vector.load %arg4[%c0_6, %c0_7] : memref<1x128xf32, #tpu.memory_space<vmem>>, vector<1x128xf32>
    %12 = vector.broadcast %11 : vector<1x128xf32> to vector<128x128xf32>
    %13 = arith.addf %10, %12 : vector<128x128xf32>
    %cst_8 = arith.constant 0.000000e+00 : f32
    %14 = vector.broadcast %cst_8 : f32 to vector<128x128xf32>
    %15 = arith.maximumf %13, %14 : vector<128x128xf32>
    %16 = arith.truncf %15 : vector<128x128xf32> to vector<128x128xbf16>
    %c0_9 = arith.constant 0 : index
    %c0_10 = arith.constant 0 : index
    %17 = vector.load %arg5[%c0_9, %c0_10] : memref<128x128xbf16, #tpu.memory_space<vmem>>, vector<128x128xbf16>
    %cst_11 = arith.constant dense<0.000000e+00> : vector<128x128xf32>
    %18 = tpu.matmul %16, %17, %cst_11 {dimension_numbers = #tpu.dot_dimension_numbers<[1], [0], [0], [1], [0, 0, 1, 1], [], []>} : vector<128x128xbf16>, vector<128x128xbf16>, vector<128x128xf32> -> vector<128x128xf32>
    %c0_12 = arith.constant 0 : index
    %c0_13 = arith.constant 0 : index
    %19 = vector.load %arg6[%c0_12, %c0_13] : memref<1x128xf32, #tpu.memory_space<vmem>>, vector<1x128xf32>
    %20 = vector.broadcast %19 : vector<1x128xf32> to vector<128x128xf32>
    %21 = arith.addf %18, %20 : vector<128x128xf32>
    %cst_14 = arith.constant 0.000000e+00 : f32
    %22 = vector.broadcast %cst_14 : f32 to vector<128x128xf32>
    %23 = arith.maximumf %21, %22 : vector<128x128xf32>
    %24 = arith.truncf %23 : vector<128x128xf32> to vector<128x128xbf16>
    %c0_15 = arith.constant 0 : index
    %c0_16 = arith.constant 0 : index
    %25 = vector.load %arg7[%c0_15, %c0_16] : memref<128x128xbf16, #tpu.memory_space<vmem>>, vector<128x128xbf16>
    %cst_17 = arith.constant dense<0.000000e+00> : vector<128x128xf32>
    %26 = tpu.matmul %24, %25, %cst_17 {dimension_numbers = #tpu.dot_dimension_numbers<[1], [0], [0], [1], [0, 0, 1, 1], [], []>} : vector<128x128xbf16>, vector<128x128xbf16>, vector<128x128xf32> -> vector<128x128xf32>
    %c0_18 = arith.constant 0 : index
    %c0_19 = arith.constant 0 : index
    %27 = vector.load %arg8[%c0_18, %c0_19] : memref<1x128xf32, #tpu.memory_space<vmem>>, vector<1x128xf32>
    %28 = vector.broadcast %27 : vector<1x128xf32> to vector<128x128xf32>
    %29 = arith.addf %26, %28 : vector<128x128xf32>
    %30 = math.tanh %29 : vector<128x128xf32>
    %c0_20 = arith.constant 0 : index
    %c0_21 = arith.constant 0 : index
    %31 = vector.load %arg9[%c0_20, %c0_21] : memref<128x128xf32, #tpu.memory_space<vmem>>, vector<128x128xf32>
    tpu.vector_store %arg9[%c0_20, %c0_21], %30 {strides = array<i32>} : memref<128x128xf32, #tpu.memory_space<vmem>>, vector<128x128xf32>,
    return
  }
  func.func @transform_0(%arg0: i32) -> (i32, i32) {
    %c0_i32 = arith.constant 0 : i32
    %c0_i32_0 = arith.constant 0 : i32
    return %arg0, %c0_i32 : i32, i32
  }
  func.func @transform_1(%arg0: i32) -> (i32, i32) {
    %c0_i32 = arith.constant 0 : i32
    %c0_i32_0 = arith.constant 0 : i32
    %c0_i32_1 = arith.constant 0 : i32
    return %c0_i32, %c0_i32_0 : i32, i32
  }
  func.func @transform_2(%arg0: i32) -> (i32, i32) {
    %c0_i32 = arith.constant 0 : i32
    %c0_i32_0 = arith.constant 0 : i32
    %c0_i32_1 = arith.constant 0 : i32
    return %c0_i32, %c0_i32_0 : i32, i32
  }
  func.func @transform_3(%arg0: i32) -> (i32, i32) {
    %c0_i32 = arith.constant 0 : i32
    %c0_i32_0 = arith.constant 0 : i32
    %c0_i32_1 = arith.constant 0 : i32
    return %c0_i32, %c0_i32_0 : i32, i32
  }
  func.func @transform_4(%arg0: i32) -> (i32, i32) {
    %c0_i32 = arith.constant 0 : i32
    %c0_i32_0 = arith.constant 0 : i32
    %c0_i32_1 = arith.constant 0 : i32
    return %c0_i32, %c0_i32_0 : i32, i32
  }
  func.func @transform_5(%arg0: i32) -> (i32, i32) {
    %c0_i32 = arith.constant 0 : i32
    %c0_i32_0 = arith.constant 0 : i32
    %c0_i32_1 = arith.constant 0 : i32
    return %c0_i32, %c0_i32_0 : i32, i32
  }
  func.func @transform_6(%arg0: i32) -> (i32, i32) {
    %c0_i32 = arith.constant 0 : i32
    %c0_i32_0 = arith.constant 0 : i32
    %c0_i32_1 = arith.constant 0 : i32
    return %c0_i32, %c0_i32_0 : i32, i32
  }
  func.func @transform_7(%arg0: i32) -> (i32, i32) {
    %c0_i32 = arith.constant 0 : i32
    %c0_i32_0 = arith.constant 0 : i32
    %c0_i32_1 = arith.constant 0 : i32
    return %c0_i32, %c0_i32_0 : i32, i32
  }
  func.func @transform_8(%arg0: i32) -> (i32, i32) {
    %c0_i32 = arith.constant 0 : i32
    %c0_i32_0 = arith.constant 0 : i32
    return %arg0, %c0_i32 : i32, i32
  }
}

</mosaic_0001>

<llo_original>
// kernel: _device_forward.1
$region0: #{_device_forward.1}
  #allocation0 [shape = 'u32[]', space=smem, size = 0x4, offset = 0x4, fixed_abs, tag = 'smem constant byte address 0x4 - core index']
  #allocation1 [shape = 'u32[144,128]{1,0:T(1,128)}', space=vmem, size = 0x12000, scoped, tag = 'internal scratch']
  %s0 = inlined_call_operand.vmem [shape: s32[256,1], index: 0, kind: input, shape index: {}]
  %s1 = inlined_call_operand.vmem [shape: f32[128,128], index: 1, kind: input, shape index: {}]
  %s2 = inlined_call_operand.vmem [shape: bf16[128,128], index: 2, kind: input, shape index: {}]
  %s3 = inlined_call_operand.vmem [shape: f32[1,128], index: 3, kind: input, shape index: {}, may-alias: {3,5,7}]
  %s4 = inlined_call_operand.vmem [shape: bf16[128,128], index: 4, kind: input, shape index: {}]
  %s5 = inlined_call_operand.vmem [shape: f32[1,128], index: 5, kind: input, shape index: {}, may-alias: {3,5,7}]
  %s6 = inlined_call_operand.vmem [shape: bf16[128,128], index: 6, kind: input, shape index: {}]
  %s7 = inlined_call_operand.vmem [shape: f32[1,128], index: 7, kind: input, shape index: {}, may-alias: {3,5,7}]
  %s8 = inlined_call_operand.vmem [shape: f32[256,128], index: 8, kind: output, shape index: {}]
  %s9 = sld [smem:[#allocation0]]
  $region65: #{_device_forward.1} parent=0
    _
  %s11 = ssub.s32 1, %s9
  %s12 = scalar_select 0, %s11, %s9
  loop: start=0, step=1, limit=4
  $region2: #{_device_forward.1} parent=0 // loop_pre_header
    _
  $region3: #{_device_forward.1} parent=0 // loop_header
    %s14 = sphi 0, %s18
    %p15 = scmp.ge.s32.totalorder %s14, 4
    %s24 = sphi 0, %s26
    %s27 = sphi 0, %s24
    %s28 = sphi 0, %s27
    %s44 = sphi 0, %s28
    %s48 = sphi 0, %s48
    %s50 = sphi 0, %s48
    %s51 = sphi 0, %s50
    %s65 = sphi 0, %s51
    %s69 = sphi 0, %s69
    %s71 = sphi 0, %s69
    %s72 = sphi 0, %s71
    %s86 = sphi 0, %s72
    %s90 = sphi 0, %s90
    %s92 = sphi 0, %s90
    %s93 = sphi 0, %s92
    %s107 = sphi 0, %s93
    %s111 = sphi 0, %s111
    %s113 = sphi 0, %s111
    %s114 = sphi 0, %s113
    %s128 = sphi 0, %s114
    %s132 = sphi 0, %s132
    %s134 = sphi 0, %s132
    %s135 = sphi 0, %s134
    %s149 = sphi 0, %s135
    %s153 = sphi 0, %s153
    %s155 = sphi 0, %s153
    %s156 = sphi 0, %s155
    %s170 = sphi 0, %s156
    %s174 = sphi 0, %s174
    %s176 = sphi 0, %s174
    %s177 = sphi 0, %s176
    %s191 = sphi 0, %s177
    %s197 = sphi 0, %s199
    %s200 = sphi 0, %s197
    %s201 = sphi 0, %s200
    %s217 = sphi 0, %s201
  $region4: #{_device_forward.1} parent=0 // loop_header_branch
    %17 = sbr.rel (%p15) target = $region8
  $region5: #{_device_forward.1} parent=0 // loop_body
    %s19 = ssub.s32 %s14, 1
    %s20 = ssub.s32 %s14, 2
    %s21 = sadd.s32 %s14, 1
    %s22 = ssub.s32 %s14, %s21
    %p23 = scmp.eq.s32.totalorder %s22, 0
    %s25 = sadd.s32 %s24, 1
    %s26 = scalar_select %p23, %s24, %s25
    %p29 = pneg %p23
    %p30 = scmp.eq.s32.totalorder %s14, 1
    %p31 = por %p29, %p30
    %p32 = scmp.ne.s32.totalorder %s24, %s27
    %p33 = scmp.eq.s32.totalorder %s14, 0
    %p34 = por %p32, %p33
    %p35 = scmp.ne.s32.totalorder %s24, %s27
    %p36 = scmp.eq.s32.totalorder %s19, 1
    %p37 = por %p35, %p36
    %p38 = scmp.ne.s32.totalorder %s27, %s28
    %p39 = scmp.eq.s32.totalorder %s19, 0
    %p40 = por %p38, %p39
    %p41 = scmp.ne.s32.totalorder %s27, %s28
    %p42 = scmp.eq.s32.totalorder %s20, 1
    %p43 = por %p41, %p42
    %p45 = scmp.ne.s32.totalorder %s28, %s44
    %p46 = scmp.eq.s32.totalorder %s20, 0
    %p47 = por %p45, %p46
    %s49 = sadd.s32 %s48, 1
    %p52 = scmp.eq.s32.totalorder %s14, 1
    %p53 = scmp.ne.s32.totalorder %s48, %s50
    %p54 = scmp.eq.s32.totalorder %s14, 0
    %p55 = por %p53, %p54
    %p56 = scmp.ne.s32.totalorder %s48, %s50
    %p57 = scmp.eq.s32.totalorder %s19, 1
    %p58 = por %p56, %p57
    %p59 = scmp.ne.s32.totalorder %s50, %s51
    %p60 = scmp.eq.s32.totalorder %s19, 0
    %p61 = por %p59, %p60
    %p62 = scmp.ne.s32.totalorder %s50, %s51
    %p63 = scmp.eq.s32.totalorder %s20, 1
    %p64 = por %p62, %p63
    %p66 = scmp.ne.s32.totalorder %s51, %s65
    %p67 = scmp.eq.s32.totalorder %s20, 0
    %p68 = por %p66, %p67
    %s70 = sadd.s32 %s69, 1
    %p73 = scmp.eq.s32.totalorder %s14, 1
    %p74 = scmp.ne.s32.totalorder %s69, %s71
    %p75 = scmp.eq.s32.totalorder %s14, 0
    %p76 = por %p74, %p75
    %p77 = scmp.ne.s32.totalorder %s69, %s71
    %p78 = scmp.eq.s32.totalorder %s19, 1
    %p79 = por %p77, %p78
    %p80 = scmp.ne.s32.totalorder %s71, %s72
    %p81 = scmp.eq.s32.totalorder %s19, 0
    %p82 = por %p80, %p81
    %p83 = scmp.ne.s32.totalorder %s71, %s72
    %p84 = scmp.eq.s32.totalorder %s20, 1
    %p85 = por %p83, %p84
    %p87 = scmp.ne.s32.totalorder %s72, %s86
    %p88 = scmp.eq.s32.totalorder %s20, 0
    %p89 = por %p87, %p88
    %s91 = sadd.s32 %s90, 1
    %p94 = scmp.eq.s32.totalorder %s14, 1
    %p95 = scmp.ne.s32.totalorder %s90, %s92
    %p96 = scmp.eq.s32.totalorder %s14, 0
    %p97 = por %p95, %p96
    %p98 = scmp.ne.s32.totalorder %s90, %s92
    %p99 = scmp.eq.s32.totalorder %s19, 1
    %p100 = por %p98, %p99
    %p101 = scmp.ne.s32.totalorder %s92, %s93
    %p102 = scmp.eq.s32.totalorder %s19, 0
    %p103 = por %p101, %p102
    %p104 = scmp.ne.s32.totalorder %s92, %s93
    %p105 = scmp.eq.s32.totalorder %s20, 1
    %p106 = por %p104, %p105
    %p108 = scmp.ne.s32.totalorder %s93, %s107
    %p109 = scmp.eq.s32.totalorder %s20, 0
    %p110 = por %p108, %p109
    %s112 = sadd.s32 %s111, 1
    %p115 = scmp.eq.s32.totalorder %s14, 1
    %p116 = scmp.ne.s32.totalorder %s111, %s113
    %p117 = scmp.eq.s32.totalorder %s14, 0
    %p118 = por %p116, %p117
    %p119 = scmp.ne.s32.totalorder %s111, %s113
    %p120 = scmp.eq.s32.totalorder %s19, 1
    %p121 = por %p119, %p120
    %p122 = scmp.ne.s32.totalorder %s113, %s114
    %p123 = scmp.eq.s32.totalorder %s19, 0
    %p124 = por %p122, %p123
    %p125 = scmp.ne.s32.totalorder %s113, %s114
    %p126 = scmp.eq.s32.totalorder %s20, 1
    %p127 = por %p125, %p126
    %p129 = scmp.ne.s32.totalorder %s114, %s128
    %p130 = scmp.eq.s32.totalorder %s20, 0
    %p131 = por %p129, %p130
    %s133 = sadd.s32 %s132, 1
    %p136 = scmp.eq.s32.totalorder %s14, 1
    %p137 = scmp.ne.s32.totalorder %s132, %s134
    %p138 = scmp.eq.s32.totalorder %s14, 0
    %p139 = por %p137, %p138
    %p140 = scmp.ne.s32.totalorder %s132, %s134
    %p141 = scmp.eq.s32.totalorder %s19, 1
    %p142 = por %p140, %p141
    %p143 = scmp.ne.s32.totalorder %s134, %s135
    %p144 = scmp.eq.s32.totalorder %s19, 0
    %p145 = por %p143, %p144
    %p146 = scmp.ne.s32.totalorder %s134, %s135
    %p147 = scmp.eq.s32.totalorder %s20, 1
    %p148 = por %p146, %p147
    %p150 = scmp.ne.s32.totalorder %s135, %s149
    %p151 = scmp.eq.s32.totalorder %s20, 0
    %p152 = por %p150, %p151
    %s154 = sadd.s32 %s153, 1
    %p157 = scmp.eq.s32.totalorder %s14, 1
    %p158 = scmp.ne.s32.totalorder %s153, %s155
    %p159 = scmp.eq.s32.totalorder %s14, 0
    %p160 = por %p158, %p159
    %p161 = scmp.ne.s32.totalorder %s153, %s155
    %p162 = scmp.eq.s32.totalorder %s19, 1
    %p163 = por %p161, %p162
    %p164 = scmp.ne.s32.totalorder %s155, %s156
    %p165 = scmp.eq.s32.totalorder %s19, 0
    %p166 = por %p164, %p165
    %p167 = scmp.ne.s32.totalorder %s155, %s156
    %p168 = scmp.eq.s32.totalorder %s20, 1
    %p169 = por %p167, %p168
    %p171 = scmp.ne.s32.totalorder %s156, %s170
    %p172 = scmp.eq.s32.totalorder %s20, 0
    %p173 = por %p171, %p172
    %s175 = sadd.s32 %s174, 1
    %p178 = scmp.eq.s32.totalorder %s14, 1
    %p179 = scmp.ne.s32.totalorder %s174, %s176
    %p180 = scmp.eq.s32.totalorder %s14, 0
    %p181 = por %p179, %p180
    %p182 = scmp.ne.s32.totalorder %s174, %s176
    %p183 = scmp.eq.s32.totalorder %s19, 1
    %p184 = por %p182, %p183
    %p185 = scmp.ne.s32.totalorder %s176, %s177
    %p186 = scmp.eq.s32.totalorder %s19, 0
    %p187 = por %p185, %p186
    %p188 = scmp.ne.s32.totalorder %s176, %s177
    %p189 = scmp.eq.s32.totalorder %s20, 1
    %p190 = por %p188, %p189
    %p192 = scmp.ne.s32.totalorder %s177, %s191
    %p193 = scmp.eq.s32.totalorder %s20, 0
    %p194 = por %p192, %p193
    %s195 = ssub.s32 %s14, %s21
    %p196 = scmp.eq.s32.totalorder %s195, 0
    %s198 = sadd.s32 %s197, 1
    %s199 = scalar_select %p196, %s197, %s198
    %p202 = pneg %p196
    %p203 = scmp.eq.s32.totalorder %s14, 1
    %p204 = por %p202, %p203
    %p205 = scmp.ne.s32.totalorder %s197, %s200
    %p206 = scmp.eq.s32.totalorder %s14, 0
    %p207 = por %p205, %p206
    %p208 = scmp.ne.s32.totalorder %s197, %s200
    %p209 = scmp.eq.s32.totalorder %s19, 1
    %p210 = por %p208, %p209
    %p211 = scmp.ne.s32.totalorder %s200, %s201
    %p212 = scmp.eq.s32.totalorder %s19, 0
    %p213 = por %p211, %p212
    %p214 = scmp.ne.s32.totalorder %s200, %s201
    %p215 = scmp.eq.s32.totalorder %s20, 1
    %p216 = por %p214, %p215
    %p218 = scmp.ne.s32.totalorder %s201, %s217
    %p219 = scmp.eq.s32.totalorder %s20, 0
    %p220 = por %p218, %p219
    %p221 = scmp.le.s32.totalorder 1, %s14
    %p222 = scmp.lt.s32.totalorder %s14, 3
    %p223 = pnand %p221, %p222
    %p224 = pneg %p223
    // Predicated region
    $region9: #{_device_forward.1} parent=5 // pred_check
      _
    $region10: #{_device_forward.1} parent=5 // pred_check_branch
      %226 = sbr.rel (%p223) target = $region12
    $region11: #{_device_forward.1} parent=5 // pred_region
      %s227 = ssub.s32 %s14, 1
      // Predicated region
      $region13: #{_device_forward.1} parent=11 // pred_check
        %p228 = pneg %p61
      $region14: #{_device_forward.1} parent=11 // pred_check_branch
        %230 = sbr.rel (%p228) target = $region16
      $region15: #{_device_forward.1} parent=11 // pred_region
        _
      $region16: #{_device_forward.1} parent=11 // pred_fallthru
        _
      // Predicated region
      $region17: #{_device_forward.1} parent=11 // pred_check
        %p231 = pneg %p82
      $region18: #{_device_forward.1} parent=11 // pred_check_branch
        %233 = sbr.rel (%p231) target = $region20
      $region19: #{_device_forward.1} parent=11 // pred_region
        _
      $region20: #{_device_forward.1} parent=11 // pred_fallthru
        _
      // Predicated region
      $region21: #{_device_forward.1} parent=11 // pred_check
        %p234 = pneg %p103
      $region22: #{_device_forward.1} parent=11 // pred_check_branch
        %236 = sbr.rel (%p234) target = $region24
      $region23: #{_device_forward.1} parent=11 // pred_region
        _
      $region24: #{_device_forward.1} parent=11 // pred_fallthru
        _
      // Predicated region
      $region25: #{_device_forward.1} parent=11 // pred_check
        %p237 = pneg %p124
      $region26: #{_device_forward.1} parent=11 // pred_check_branch
        %239 = sbr.rel (%p237) target = $region28
      $region27: #{_device_forward.1} parent=11 // pred_region
        _
      $region28: #{_device_forward.1} parent=11 // pred_fallthru
        _
      // Predicated region
      $region29: #{_device_forward.1} parent=11 // pred_check
        %p240 = pneg %p145
      $region30: #{_device_forward.1} parent=11 // pred_check_branch
        %242 = sbr.rel (%p240) target = $region32
      $region31: #{_device_forward.1} parent=11 // pred_region
        _
      $region32: #{_device_forward.1} parent=11 // pred_fallthru
        _
      // Predicated region
      $region33: #{_device_forward.1} parent=11 // pred_check
        %p243 = pneg %p166
      $region34: #{_device_forward.1} parent=11 // pred_check_branch
        %245 = sbr.rel (%p243) target = $region36
      $region35: #{_device_forward.1} parent=11 // pred_region
        _
      $region36: #{_device_forward.1} parent=11 // pred_fallthru
        _
      // Predicated region
      $region37: #{_device_forward.1} parent=11 // pred_check
        %p246 = pneg %p187
      $region38: #{_device_forward.1} parent=11 // pred_check_branch
        %248 = sbr.rel (%p246) target = $region40
      $region39: #{_device_forward.1} parent=11 // pred_region
        _
      $region40: #{_device_forward.1} parent=11 // pred_fallthru
        _
    $region12: #{_device_forward.1} parent=5 // pred_fallthru
      _
    %p249 = scmp.lt.s32.totalorder %s14, 2
    // Predicated region
    $region41: #{_device_forward.1} parent=5 // pred_check
      %p250 = pneg %p249
    $region42: #{_device_forward.1} parent=5 // pred_check_branch
      %252 = sbr.rel (%p250) target = $region44
    $region43: #{_device_forward.1} parent=5 // pred_region
      // Predicated region
      $region45: #{_device_forward.1} parent=43 // pred_check
        %p253 = pneg %p34
      $region46: #{_device_forward.1} parent=43 // pred_check_branch
        %255 = sbr.rel (%p253) target = $region48
      $region47: #{_device_forward.1} parent=43 // pred_region
        %s256 = smul.u32 16, %s14
        %p257 = scmp.lt.s32.totalorder %s256, 31
        %s258 = scalar_select %p257, %s256, 31
        %s259 = smul.addr %s258, 8
        %s260 = scalar_lea.vmem %s0, %s259
        %s261 = smul.u32 16, %s14
      $region48: #{_device_forward.1} parent=43 // pred_fallthru
        _
    $region44: #{_device_forward.1} parent=5 // pred_fallthru
      _
    %p262 = scmp.le.s32.totalorder 1, %s14
    %p263 = scmp.lt.s32.totalorder %s14, 3
    %p264 = pnand %p262, %p263
    %p265 = pneg %p264
    // Predicated region
    $region49: #{_device_forward.1} parent=5 // pred_check
      _
    $region50: #{_device_forward.1} parent=5 // pred_check_branch
      %267 = sbr.rel (%p264) target = $region52
    $region51: #{_device_forward.1} parent=5 // pred_region
      %s268 = ssub.s32 %s14, 1
      %s269 = smul.u32 16, %s19
      %p270 = scmp.lt.s32.totalorder %s269, 31
      %s271 = scalar_select %p270, %s269, 31
      %s272 = smul.addr %s271, 8
      %s273 = scalar_lea.vmem %s0, %s272
      %p274 = pneg %p40
      %p275 = pneg %p37
      %p276 = pneg %p61
      %p277 = pneg %p58
      %p278 = pneg %p82
      %p279 = pneg %p79
      %p280 = pneg %p103
      %p281 = pneg %p100
      %p282 = pneg %p124
      %p283 = pneg %p121
      %p284 = pneg %p145
      %p285 = pneg %p142
      %p286 = pneg %p166
      %p287 = pneg %p163
      %p288 = pneg %p187
      %p289 = pneg %p184
      %p290 = pneg %p213
      %p291 = pneg %p210
      %s292 = smul.u32 16, %s19
      %p293 = scmp.lt.s32.totalorder %s292, 31
      %s294 = scalar_select %p293, %s292, 31
      %s295 = smul.addr %s294, 8
      %s296 = scalar_lea.vmem %s8, %s295
      %s297 = smul.u32 16, %s19
      %p298 = scmp.lt.s32.totalorder %s297, 31
      %s299 = scalar_select %p298, %s297, 31
      %s300 = smul.addr %s299, 8
      %s301 = scalar_lea.vmem %s0, %s300
      %s302 = smul.u32 16, %s19
      %s303 = smul.u32 16, %s19
      %p304 = scmp.lt.s32.totalorder %s303, 31
      %s305 = scalar_select %p304, %s303, 31
      %s306 = smul.addr %s305, 8
      %s307 = scalar_lea.vmem %s8, %s306
      %s308 = smul.u32 16, %s19
      %v310 = vld [vmem:[%s301] sm:$0xff]
      %v311 = vld [vmem:[%s301 + $0x8] sm:$0xff]
      %v312 = vld [vmem:[%s301 + $0x10] sm:$0xff]
      %v313 = vld [vmem:[%s301 + $0x18] sm:$0xff]
      %v314 = vld [vmem:[%s301 + $0x20] sm:$0xff]
      %v315 = vld [vmem:[%s301 + $0x28] sm:$0xff]
      %v316 = vld [vmem:[%s301 + $0x30] sm:$0xff]
      %v317 = vld [vmem:[%s301 + $0x38] sm:$0xff]
      %v318 = vld [vmem:[%s301 + $0x40] sm:$0xff]
      %v319 = vld [vmem:[%s301 + $0x48] sm:$0xff]
      %v320 = vld [vmem:[%s301 + $0x50] sm:$0xff]
      %v321 = vld [vmem:[%s301 + $0x58] sm:$0xff]
      %v322 = vld [vmem:[%s301 + $0x60] sm:$0xff]
      %v323 = vld [vmem:[%s301 + $0x68] sm:$0xff]
      %v324 = vld [vmem:[%s301 + $0x70] sm:$0xff]
      %v325 = vld [vmem:[%s301 + $0x78] sm:$0xff]
      %v326 = vlaneseq
      %v327 = vand.u32 %v326, 127
      %328 = vset.pattern.permute.xlu0 0
      %329 = vperm.xlu0 %328, %v310
      %v330 = vpop.permute.xlu0 %329
      %331 = vset.pattern.permute.xlu0 0
      %332 = vperm.xlu0 %331, %v311
      %v333 = vpop.permute.xlu0 %332
      %334 = vset.pattern.permute.xlu0 0
      %335 = vperm.xlu0 %334, %v312
      %v336 = vpop.permute.xlu0 %335
      %337 = vset.pattern.permute.xlu0 0
      %338 = vperm.xlu0 %337, %v313
      %v339 = vpop.permute.xlu0 %338
      %340 = vset.pattern.permute.xlu0 0
      %341 = vperm.xlu0 %340, %v314
      %v342 = vpop.permute.xlu0 %341
      %343 = vset.pattern.permute.xlu0 0
      %344 = vperm.xlu0 %343, %v315
      %v345 = vpop.permute.xlu0 %344
      %346 = vset.pattern.permute.xlu0 0
      %347 = vperm.xlu0 %346, %v316
      %v348 = vpop.permute.xlu0 %347
      %349 = vset.pattern.permute.xlu0 0
      %350 = vperm.xlu0 %349, %v317
      %v351 = vpop.permute.xlu0 %350
      %352 = vset.pattern.permute.xlu0 0
      %353 = vperm.xlu0 %352, %v318
      %v354 = vpop.permute.xlu0 %353
      %355 = vset.pattern.permute.xlu0 0
      %356 = vperm.xlu0 %355, %v319
      %v357 = vpop.permute.xlu0 %356
      %358 = vset.pattern.permute.xlu0 0
      %359 = vperm.xlu0 %358, %v320
      %v360 = vpop.permute.xlu0 %359
      %361 = vset.pattern.permute.xlu0 0
      %362 = vperm.xlu0 %361, %v321
      %v363 = vpop.permute.xlu0 %362
      %364 = vset.pattern.permute.xlu0 0
      %365 = vperm.xlu0 %364, %v322
      %v366 = vpop.permute.xlu0 %365
      %367 = vset.pattern.permute.xlu0 0
      %368 = vperm.xlu0 %367, %v323
      %v369 = vpop.permute.xlu0 %368
      %370 = vset.pattern.permute.xlu0 0
      %371 = vperm.xlu0 %370, %v324
      %v372 = vpop.permute.xlu0 %371
      %373 = vset.pattern.permute.xlu0 0
      %374 = vperm.xlu0 %373, %v325
      %v375 = vpop.permute.xlu0 %374
      %vm376 = vcmp.eq.s32.totalorder %v327, %v330
      %vm377 = vcmp.eq.s32.totalorder %v327, %v333
      %vm378 = vcmp.eq.s32.totalorder %v327, %v336
      %vm379 = vcmp.eq.s32.totalorder %v327, %v339
      %vm380 = vcmp.eq.s32.totalorder %v327, %v342
      %vm381 = vcmp.eq.s32.totalorder %v327, %v345
      %vm382 = vcmp.eq.s32.totalorder %v327, %v348
      %vm383 = vcmp.eq.s32.totalorder %v327, %v351
      %vm384 = vcmp.eq.s32.totalorder %v327, %v354
      %vm385 = vcmp.eq.s32.totalorder %v327, %v357
      %vm386 = vcmp.eq.s32.totalorder %v327, %v360
      %vm387 = vcmp.eq.s32.totalorder %v327, %v363
      %vm388 = vcmp.eq.s32.totalorder %v327, %v366
      %vm389 = vcmp.eq.s32.totalorder %v327, %v369
      %vm390 = vcmp.eq.s32.totalorder %v327, %v372
      %vm391 = vcmp.eq.s32.totalorder %v327, %v375
      %v392 = vsel %vm376, 1, 0
      %v393 = vsel %vm377, 1, 0
      %v394 = vsel %vm378, 1, 0
      %v395 = vsel %vm379, 1, 0
      %v396 = vsel %vm380, 1, 0
      %v397 = vsel %vm381, 1, 0
      %v398 = vsel %vm382, 1, 0
      %v399 = vsel %vm383, 1, 0
      %v400 = vsel %vm384, 1, 0
      %v401 = vsel %vm385, 1, 0
      %v402 = vsel %vm386, 1, 0
      %v403 = vsel %vm387, 1, 0
      %v404 = vsel %vm388, 1, 0
      %v405 = vsel %vm389, 1, 0
      %v406 = vsel %vm390, 1, 0
      %v407 = vsel %vm391, 1, 0
      %v408 = vcvt.s32.f32 %v392
      %v409 = vcvt.s32.f32 %v393
      %v410 = vcvt.s32.f32 %v394
      %v411 = vcvt.s32.f32 %v395
      %v412 = vcvt.s32.f32 %v396
      %v413 = vcvt.s32.f32 %v397
      %v414 = vcvt.s32.f32 %v398
      %v415 = vcvt.s32.f32 %v399
      %v416 = vcvt.s32.f32 %v400
      %v417 = vcvt.s32.f32 %v401
      %v418 = vcvt.s32.f32 %v402
      %v419 = vcvt.s32.f32 %v403
      %v420 = vcvt.s32.f32 %v404
      %v421 = vcvt.s32.f32 %v405
      %v422 = vcvt.s32.f32 %v406
      %v423 = vcvt.s32.f32 %v407
      %v424 = vld [vmem:[%s1] sm:$0xff]
      %v425 = vld [vmem:[%s1 + $0x8] sm:$0xff]
      %v426 = vld [vmem:[%s1 + $0x10] sm:$0xff]
      %v427 = vld [vmem:[%s1 + $0x18] sm:$0xff]
      %v428 = vld [vmem:[%s1 + $0x20] sm:$0xff]
      %v429 = vld [vmem:[%s1 + $0x28] sm:$0xff]
      %v430 = vld [vmem:[%s1 + $0x30] sm:$0xff]
      %v431 = vld [vmem:[%s1 + $0x38] sm:$0xff]
      %v432 = vld [vmem:[%s1 + $0x40] sm:$0xff]
      %v433 = vld [vmem:[%s1 + $0x48] sm:$0xff]
      %v434 = vld [vmem:[%s1 + $0x50] sm:$0xff]
      %v435 = vld [vmem:[%s1 + $0x58] sm:$0xff]
      %v436 = vld [vmem:[%s1 + $0x60] sm:$0xff]
      %v437 = vld [vmem:[%s1 + $0x68] sm:$0xff]
      %v438 = vld [vmem:[%s1 + $0x70] sm:$0xff]
      %v439 = vld [vmem:[%s1 + $0x78] sm:$0xff]
      %440 = vmatprep.subr.mxu0 0.0
      %441 = vmatpush1.msra.mxu0 %v424
      %442 = vmatprep.subr.mxu0 0.0
      %443 = vmatpush1.msra.mxu0 %v425
      %444 = vmatprep.subr.mxu0 0.0
      %445 = vmatpush1.msra.mxu0 %v426
      %446 = vmatprep.subr.mxu0 0.0
      %447 = vmatpush1.msra.mxu0 %v427
      %448 = vmatprep.subr.mxu0 0.0
      %449 = vmatpush1.msra.mxu0 %v428
      %450 = vmatprep.subr.mxu0 0.0
      %451 = vmatpush1.msra.mxu0 %v429
      %452 = vmatprep.subr.mxu0 0.0
      %453 = vmatpush1.msra.mxu0 %v430
      %454 = vmatprep.subr.mxu0 0.0
      %455 = vmatpush1.msra.mxu0 %v431
      %456 = vmatprep.subr.mxu0 0.0
      %457 = vmatpush1.msra.mxu0 %v432
      %458 = vmatprep.subr.mxu0 0.0
      %459 = vmatpush1.msra.mxu0 %v433
      %460 = vmatprep.subr.mxu0 0.0
      %461 = vmatpush1.msra.mxu0 %v434
      %462 = vmatprep.subr.mxu0 0.0
      %463 = vmatpush1.msra.mxu0 %v435
      %464 = vmatprep.subr.mxu0 0.0
      %465 = vmatpush1.msra.mxu0 %v436
      %466 = vmatprep.subr.mxu0 0.0
      %467 = vmatpush1.msra.mxu0 %v437
      %468 = vmatprep.subr.mxu0 0.0
      %469 = vmatpush1.msra.mxu0 %v438
      %470 = vmatprep.subr.mxu0 0.0
      %471 = vmatpush1.msra.mxu0 %v439
      %472 = vmatprep.subr.mxu0 0.0
      %473 = vmatpush1.msra.mxu0 0.0
      %474 = vmatprep.subr.mxu0 0.0
      %475 = vmatpush1.msra.mxu0 0.0
      %476 = vmatprep.subr.mxu0 0.0
      %477 = vmatpush1.msra.mxu0 0.0
      %478 = vmatprep.subr.mxu0 0.0
      %479 = vmatpush1.msra.mxu0 0.0
      %480 = vmatprep.subr.mxu0 0.0
      %481 = vmatpush1.msra.mxu0 0.0
      %482 = vmatprep.subr.mxu0 0.0
      %483 = vmatpush1.msra.mxu0 0.0
      %484 = vmatprep.subr.mxu0 0.0
      %485 = vmatpush1.msra.mxu0 0.0
      %486 = vmatprep.subr.mxu0 0.0
      %487 = vmatpush1.msra.mxu0 0.0
      %488 = vmatprep.subr.mxu0 0.0
      %489 = vmatpush1.msra.mxu0 0.0
      %490 = vmatprep.subr.mxu0 0.0
      %491 = vmatpush1.msra.mxu0 0.0
      %492 = vmatprep.subr.mxu0 0.0
      %493 = vmatpush1.msra.mxu0 0.0
      %494 = vmatprep.subr.mxu0 0.0
      %495 = vmatpush1.msra.mxu0 0.0
      %496 = vmatprep.subr.mxu0 0.0
      %497 = vmatpush1.msra.mxu0 0.0
      %498 = vmatprep.subr.mxu0 0.0
      %499 = vmatpush1.msra.mxu0 0.0
      %500 = vmatprep.subr.mxu0 0.0
      %501 = vmatpush1.msra.mxu0 0.0
      %502 = vmatprep.subr.mxu0 0.0
      %503 = vmatpush1.msra.mxu0 0.0
      %504 = vmatprep.mubr.f32.mxu0 0.0
      %505 = vmatmul.mubr.f32.gmra.mrb[0].mxu0 %v408
      %v506 = vpop.f32.mrb[0].mxu0
      %v507 = vadd.f32 0.0, %v506
      %v508 = vpop.f32.mrb[0].mxu0
      %509 = vmatprep.mubr.f32.mxu0 0.0
      %510 = vmatmul.mubr.f32.gmra.mrb[0].mxu0 %v409
      %v511 = vpop.f32.mrb[0].mxu0
      %v512 = vadd.f32 0.0, %v511
      %v513 = vpop.f32.mrb[0].mxu0
      %514 = vmatprep.mubr.f32.mxu0 0.0
      %515 = vmatmul.mubr.f32.gmra.mrb[0].mxu0 %v410
      %v516 = vpop.f32.mrb[0].mxu0
      %v517 = vadd.f32 0.0, %v516
      %v518 = vpop.f32.mrb[0].mxu0
      %519 = vmatprep.mubr.f32.mxu0 0.0
      %520 = vmatmul.mubr.f32.gmra.mrb[0].mxu0 %v411
      %v521 = vpop.f32.mrb[0].mxu0
      %v522 = vadd.f32 0.0, %v521
      %v523 = vpop.f32.mrb[0].mxu0
      %524 = vmatprep.mubr.f32.mxu0 0.0
      %525 = vmatmul.mubr.f32.gmra.mrb[0].mxu0 %v412
      %v526 = vpop.f32.mrb[0].mxu0
      %v527 = vadd.f32 0.0, %v526
      %v528 = vpop.f32.mrb[0].mxu0
      %529 = vmatprep.mubr.f32.mxu0 0.0
      %530 = vmatmul.mubr.f32.gmra.mrb[0].mxu0 %v413
      %v531 = vpop.f32.mrb[0].mxu0
      %v532 = vadd.f32 0.0, %v531
      %v533 = vpop.f32.mrb[0].mxu0
      %534 = vmatprep.mubr.f32.mxu0 0.0
      %535 = vmatmul.mubr.f32.gmra.mrb[0].mxu0 %v414
      %v536 = vpop.f32.mrb[0].mxu0
      %v537 = vadd.f32 0.0, %v536
      %v538 = vpop.f32.mrb[0].mxu0
      %539 = vmatprep.mubr.f32.mxu0 0.0
      %540 = vmatmul.mubr.f32.gmra.mrb[0].mxu0 %v415
      %v541 = vpop.f32.mrb[0].mxu0
      %v542 = vadd.f32 0.0, %v541
      %v543 = vpop.f32.mrb[0].mxu0
      %544 = vmatprep.mubr.f32.mxu0 0.0
      %545 = vmatmul.mubr.f32.gmra.mrb[0].mxu0 %v416
      %v546 = vpop.f32.mrb[0].mxu0
      %v547 = vadd.f32 0.0, %v546
      %v548 = vpop.f32.mrb[0].mxu0
      %549 = vmatprep.mubr.f32.mxu0 0.0
      %550 = vmatmul.mubr.f32.gmra.mrb[0].mxu0 %v417
      %v551 = vpop.f32.mrb[0].mxu0
      %v552 = vadd.f32 0.0, %v551
      %v553 = vpop.f32.mrb[0].mxu0
      %554 = vmatprep.mubr.f32.mxu0 0.0
      %555 = vmatmul.mubr.f32.gmra.mrb[0].mxu0 %v418
      %v556 = vpop.f32.mrb[0].mxu0
      %v557 = vadd.f32 0.0, %v556
      %v558 = vpop.f32.mrb[0].mxu0
      %559 = vmatprep.mubr.f32.mxu0 0.0
      %560 = vmatmul.mubr.f32.gmra.mrb[0].mxu0 %v419
      %v561 = vpop.f32.mrb[0].mxu0
      %v562 = vadd.f32 0.0, %v561
      %v563 = vpop.f32.mrb[0].mxu0
      %564 = vmatprep.mubr.f32.mxu0 0.0
      %565 = vmatmul.mubr.f32.gmra.mrb[0].mxu0 %v420
      %v566 = vpop.f32.mrb[0].mxu0
      %v567 = vadd.f32 0.0, %v566
      %v568 = vpop.f32.mrb[0].mxu0
      %569 = vmatprep.mubr.f32.mxu0 0.0
      %570 = vmatmul.mubr.f32.gmra.mrb[0].mxu0 %v421
      %v571 = vpop.f32.mrb[0].mxu0
      %v572 = vadd.f32 0.0, %v571
      %v573 = vpop.f32.mrb[0].mxu0
      %574 = vmatprep.mubr.f32.mxu0 0.0
      %575 = vmatmul.mubr.f32.gmra.mrb[0].mxu0 %v422
      %v576 = vpop.f32.mrb[0].mxu0
      %v577 = vadd.f32 0.0, %v576
      %v578 = vpop.f32.mrb[0].mxu0
      %579 = vmatprep.mubr.f32.mxu0 0.0
      %580 = vmatmul.mubr.f32.gmra.mrb[0].mxu0 %v423
      %v581 = vpop.f32.mrb[0].mxu0
      %v582 = vadd.f32 0.0, %v581
      %v583 = vpop.f32.mrb[0].mxu0
      %584 = vdwg.mxu0
      %v585 = vpack.c.bf16 %v512, %v507
      %v586 = vpack.c.bf16 %v522, %v517
      %v587 = vpack.c.bf16 %v532, %v527
      %v588 = vpack.c.bf16 %v542, %v537
      %v589 = vpack.c.bf16 %v552, %v547
      %v590 = vpack.c.bf16 %v562, %v557
      %v591 = vpack.c.bf16 %v572, %v567
      %v592 = vpack.c.bf16 %v582, %v577
      %v593 = vld [vmem:[%s2] sm:$0xf]
      %v594 = vld [vmem:[%s2 + $0x4] sm:$0xf]
      %v595 = vld [vmem:[%s2 + $0x8] sm:$0xf]
      %v596 = vld [vmem:[%s2 + $0xc] sm:$0xf]
      %v597 = vld [vmem:[%s2 + $0x10] sm:$0xf]
      %v598 = vld [vmem:[%s2 + $0x14] sm:$0xf]
      %v599 = vld [vmem:[%s2 + $0x18] sm:$0xf]
      %v600 = vld [vmem:[%s2 + $0x1c] sm:$0xf]
      %v601 = vld [vmem:[%s2 + $0x20] sm:$0xf]
      %v602 = vld [vmem:[%s2 + $0x24] sm:$0xf]
      %v603 = vld [vmem:[%s2 + $0x28] sm:$0xf]
      %v604 = vld [vmem:[%s2 + $0x2c] sm:$0xf]
      %v605 = vld [vmem:[%s2 + $0x30] sm:$0xf]
      %v606 = vld [vmem:[%s2 + $0x34] sm:$0xf]
      %v607 = vld [vmem:[%s2 + $0x38] sm:$0xf]
      %v608 = vld [vmem:[%s2 + $0x3c] sm:$0xf]
      %v609 = vld [vmem:[%s3] sm:$0x1]
      %v611 = vlaneseq
      %v612 = vshrl.u32 %v611, 7
      %v613 = vsub.s32 0, %v612
      %v614 = vrot.slane %v609, %v613
      %v632 = vunpack.c.l.b16 %v593
      %v633 = vunpack.c.l.b16 %v594
      %v634 = vunpack.c.l.b16 %v595
      %v635 = vunpack.c.l.b16 %v596
      %v636 = vunpack.c.l.b16 %v597
      %v637 = vunpack.c.l.b16 %v598
      %v638 = vunpack.c.l.b16 %v599
      %v639 = vunpack.c.l.b16 %v600
      %v640 = vunpack.c.l.b16 %v601
      %v641 = vunpack.c.l.b16 %v602
      %v642 = vunpack.c.l.b16 %v603
      %v643 = vunpack.c.l.b16 %v604
      %v644 = vunpack.c.l.b16 %v605
      %v645 = vunpack.c.l.b16 %v606
      %v646 = vunpack.c.l.b16 %v607
      %v647 = vunpack.c.l.b16 %v608
      %v648 = vpack.c.b16 %v633, %v632
      %v649 = vpack.c.b16 %v635, %v634
      %v650 = vpack.c.b16 %v637, %v636
      %v651 = vpack.c.b16 %v639, %v638
      %v652 = vpack.c.b16 %v641, %v640
      %v653 = vpack.c.b16 %v643, %v642
      %v654 = vpack.c.b16 %v645, %v644
      %v655 = vpack.c.b16 %v647, %v646
      %664 = vmatprep.subr.bf16.mxu0 0
      %665 = vmatpush1.bf16.msra.mxu0 %v648
      %666 = vmatprep.subr.bf16.mxu0 0
      %667 = vmatpush1.bf16.msra.mxu0 %v649
      %668 = vmatprep.subr.bf16.mxu0 0
      %669 = vmatpush1.bf16.msra.mxu0 %v650
      %670 = vmatprep.subr.bf16.mxu0 0
      %671 = vmatpush1.bf16.msra.mxu0 %v651
      %672 = vmatprep.subr.bf16.mxu0 0
      %673 = vmatpush1.bf16.msra.mxu0 %v652
      %674 = vmatprep.subr.bf16.mxu0 0
      %675 = vmatpush1.bf16.msra.mxu0 %v653
      %676 = vmatprep.subr.bf16.mxu0 0
      %677 = vmatpush1.bf16.msra.mxu0 %v654
      %678 = vmatprep.subr.bf16.mxu0 0
      %679 = vmatpush1.bf16.msra.mxu0 %v655
      %680 = vmatprep.subr.bf16.mxu0 0
      %681 = vmatpush1.bf16.msra.mxu0 0
      %682 = vmatprep.subr.bf16.mxu0 0
      %683 = vmatpush1.bf16.msra.mxu0 0
      %684 = vmatprep.subr.bf16.mxu0 0
      %685 = vmatpush1.bf16.msra.mxu0 0
      %686 = vmatprep.subr.bf16.mxu0 0
      %687 = vmatpush1.bf16.msra.mxu0 0
      %688 = vmatprep.subr.bf16.mxu0 0
      %689 = vmatpush1.bf16.msra.mxu0 0
      %690 = vmatprep.subr.bf16.mxu0 0
      %691 = vmatpush1.bf16.msra.mxu0 0
      %692 = vmatprep.subr.bf16.mxu0 0
      %693 = vmatpush1.bf16.msra.mxu0 0
      %694 = vmatprep.subr.bf16.mxu0 0
      %695 = vmatpush1.bf16.msra.mxu0 0
      %696 = vmatprep.mubr.bf16.mxu0 0
      %697 = vmatmul.mubr.bf16.gmra.mrb[0].mxu0 %v585
      %v698 = vpop.f32.mrb[0].mxu0
      %v699 = vadd.f32 %v614, %v698
      %v700 = vpop.f32.mrb[0].mxu0
      %v701 = vpop.f32.mrb[0].mxu0
      %v702 = vadd.f32 %v614, %v701
      %v703 = vpop.f32.mrb[0].mxu0
      %704 = vmatprep.mubr.bf16.mxu0 0
      %705 = vmatmul.mubr.bf16.gmra.mrb[0].mxu0 %v586
      %v706 = vpop.f32.mrb[0].mxu0
      %v707 = vadd.f32 %v614, %v706
      %v708 = vpop.f32.mrb[0].mxu0
      %v709 = vpop.f32.mrb[0].mxu0
      %v710 = vadd.f32 %v614, %v709
      %v711 = vpop.f32.mrb[0].mxu0
      %712 = vmatprep.mubr.bf16.mxu0 0
      %713 = vmatmul.mubr.bf16.gmra.mrb[0].mxu0 %v587
      %v714 = vpop.f32.mrb[0].mxu0
      %v715 = vadd.f32 %v614, %v714
      %v716 = vpop.f32.mrb[0].mxu0
      %v717 = vpop.f32.mrb[0].mxu0
      %v718 = vadd.f32 %v614, %v717
      %v719 = vpop.f32.mrb[0].mxu0
      %720 = vmatprep.mubr.bf16.mxu0 0
      %721 = vmatmul.mubr.bf16.gmra.mrb[0].mxu0 %v588
      %v722 = vpop.f32.mrb[0].mxu0
      %v723 = vadd.f32 %v614, %v722
      %v724 = vpop.f32.mrb[0].mxu0
      %v725 = vpop.f32.mrb[0].mxu0
      %v726 = vadd.f32 %v614, %v725
      %v727 = vpop.f32.mrb[0].mxu0
      %728 = vmatprep.mubr.bf16.mxu0 0
      %729 = vmatmul.mubr.bf16.gmra.mrb[0].mxu0 %v589
      %v730 = vpop.f32.mrb[0].mxu0
      %v731 = vadd.f32 %v614, %v730
      %v732 = vpop.f32.mrb[0].mxu0
      %v733 = vpop.f32.mrb[0].mxu0
      %v734 = vadd.f32 %v614, %v733
      %v735 = vpop.f32.mrb[0].mxu0
      %736 = vmatprep.mubr.bf16.mxu0 0
      %737 = vmatmul.mubr.bf16.gmra.mrb[0].mxu0 %v590
      %v738 = vpop.f32.mrb[0].mxu0
      %v739 = vadd.f32 %v614, %v738
      %v740 = vpop.f32.mrb[0].mxu0
      %v741 = vpop.f32.mrb[0].mxu0
      %v742 = vadd.f32 %v614, %v741
      %v743 = vpop.f32.mrb[0].mxu0
      %744 = vmatprep.mubr.bf16.mxu0 0
      %745 = vmatmul.mubr.bf16.gmra.mrb[0].mxu0 %v591
      %v746 = vpop.f32.mrb[0].mxu0
      %v747 = vadd.f32 %v614, %v746
      %v748 = vpop.f32.mrb[0].mxu0
      %v749 = vpop.f32.mrb[0].mxu0
      %v750 = vadd.f32 %v614, %v749
      %v751 = vpop.f32.mrb[0].mxu0
      %752 = vmatprep.mubr.bf16.mxu0 0
      %753 = vmatmul.mubr.bf16.gmra.mrb[0].mxu0 %v592
      %v754 = vpop.f32.mrb[0].mxu0
      %v755 = vadd.f32 %v614, %v754
      %v756 = vpop.f32.mrb[0].mxu0
      %v757 = vpop.f32.mrb[0].mxu0
      %v758 = vadd.f32 %v614, %v757
      %v759 = vpop.f32.mrb[0].mxu0
      %760 = vdwg.mxu0
      %v761 = vmax.f32 %v699, 0.0
      %v762 = vmax.f32 %v702, 0.0
      %v763 = vmax.f32 %v707, 0.0
      %v764 = vmax.f32 %v710, 0.0
      %v765 = vmax.f32 %v715, 0.0
      %v766 = vmax.f32 %v718, 0.0
      %v767 = vmax.f32 %v723, 0.0
      %v768 = vmax.f32 %v726, 0.0
      %v769 = vmax.f32 %v731, 0.0
      %v770 = vmax.f32 %v734, 0.0
      %v771 = vmax.f32 %v739, 0.0
      %v772 = vmax.f32 %v742, 0.0
      %v773 = vmax.f32 %v747, 0.0
      %v774 = vmax.f32 %v750, 0.0
      %v775 = vmax.f32 %v755, 0.0
      %v776 = vmax.f32 %v758, 0.0
      %v777 = vpack.c.bf16 %v762, %v761
      %v778 = vpack.c.bf16 %v764, %v763
      %v779 = vpack.c.bf16 %v766, %v765
      %v780 = vpack.c.bf16 %v768, %v767
      %v781 = vpack.c.bf16 %v770, %v769
      %v782 = vpack.c.bf16 %v772, %v771
      %v783 = vpack.c.bf16 %v774, %v773
      %v784 = vpack.c.bf16 %v776, %v775
      %v785 = vld [vmem:[%s4] sm:$0xf]
      %v786 = vld [vmem:[%s4 + $0x4] sm:$0xf]
      %v787 = vld [vmem:[%s4 + $0x8] sm:$0xf]
      %v788 = vld [vmem:[%s4 + $0xc] sm:$0xf]
      %v789 = vld [vmem:[%s4 + $0x10] sm:$0xf]
      %v790 = vld [vmem:[%s4 + $0x14] sm:$0xf]
      %v791 = vld [vmem:[%s4 + $0x18] sm:$0xf]
      %v792 = vld [vmem:[%s4 + $0x1c] sm:$0xf]
      %v793 = vld [vmem:[%s4 + $0x20] sm:$0xf]
      %v794 = vld [vmem:[%s4 + $0x24] sm:$0xf]
      %v795 = vld [vmem:[%s4 + $0x28] sm:$0xf]
      %v796 = vld [vmem:[%s4 + $0x2c] sm:$0xf]
      %v797 = vld [vmem:[%s4 + $0x30] sm:$0xf]
      %v798 = vld [vmem:[%s4 + $0x34] sm:$0xf]
      %v799 = vld [vmem:[%s4 + $0x38] sm:$0xf]
      %v800 = vld [vmem:[%s4 + $0x3c] sm:$0xf]
      %v801 = vld [vmem:[%s5] sm:$0x1]
      %v803 = vlaneseq
      %v804 = vshrl.u32 %v803, 7
      %v805 = vsub.s32 0, %v804
      %v806 = vrot.slane %v801, %v805
      %v824 = vunpack.c.l.b16 %v785
      %v825 = vunpack.c.l.b16 %v786
      %v826 = vunpack.c.l.b16 %v787
      %v827 = vunpack.c.l.b16 %v788
      %v828 = vunpack.c.l.b16 %v789
      %v829 = vunpack.c.l.b16 %v790
      %v830 = vunpack.c.l.b16 %v791
      %v831 = vunpack.c.l.b16 %v792
      %v832 = vunpack.c.l.b16 %v793
      %v833 = vunpack.c.l.b16 %v794
      %v834 = vunpack.c.l.b16 %v795
      %v835 = vunpack.c.l.b16 %v796
      %v836 = vunpack.c.l.b16 %v797
      %v837 = vunpack.c.l.b16 %v798
      %v838 = vunpack.c.l.b16 %v799
      %v839 = vunpack.c.l.b16 %v800
      %v840 = vpack.c.b16 %v825, %v824
      %v841 = vpack.c.b16 %v827, %v826
      %v842 = vpack.c.b16 %v829, %v828
      %v843 = vpack.c.b16 %v831, %v830
      %v844 = vpack.c.b16 %v833, %v832
      %v845 = vpack.c.b16 %v835, %v834
      %v846 = vpack.c.b16 %v837, %v836
      %v847 = vpack.c.b16 %v839, %v838
      %856 = vmatprep.subr.bf16.mxu0 0
      %857 = vmatpush1.bf16.msra.mxu0 %v840
      %858 = vmatprep.subr.bf16.mxu0 0
      %859 = vmatpush1.bf16.msra.mxu0 %v841
      %860 = vmatprep.subr.bf16.mxu0 0
      %861 = vmatpush1.bf16.msra.mxu0 %v842
      %862 = vmatprep.subr.bf16.mxu0 0
      %863 = vmatpush1.bf16.msra.mxu0 %v843
      %864 = vmatprep.subr.bf16.mxu0 0
      %865 = vmatpush1.bf16.msra.mxu0 %v844
      %866 = vmatprep.subr.bf16.mxu0 0
      %867 = vmatpush1.bf16.msra.mxu0 %v845
      %868 = vmatprep.subr.bf16.mxu0 0
      %869 = vmatpush1.bf16.msra.mxu0 %v846
      %870 = vmatprep.subr.bf16.mxu0 0
      %871 = vmatpush1.bf16.msra.mxu0 %v847
      %872 = vmatprep.subr.bf16.mxu0 0
      %873 = vmatpush1.bf16.msra.mxu0 0
      %874 = vmatprep.subr.bf16.mxu0 0
      %875 = vmatpush1.bf16.msra.mxu0 0
      %876 = vmatprep.subr.bf16.mxu0 0
      %877 = vmatpush1.bf16.msra.mxu0 0
      %878 = vmatprep.subr.bf16.mxu0 0
      %879 = vmatpush1.bf16.msra.mxu0 0
      %880 = vmatprep.subr.bf16.mxu0 0
      %881 = vmatpush1.bf16.msra.mxu0 0
      %882 = vmatprep.subr.bf16.mxu0 0
      %883 = vmatpush1.bf16.msra.mxu0 0
      %884 = vmatprep.subr.bf16.mxu0 0
      %885 = vmatpush1.bf16.msra.mxu0 0
      %886 = vmatprep.subr.bf16.mxu0 0
      %887 = vmatpush1.bf16.msra.mxu0 0
      %888 = vmatprep.mubr.bf16.mxu0 0
      %889 = vmatmul.mubr.bf16.gmra.mrb[0].mxu0 %v777
      %v890 = vpop.f32.mrb[0].mxu0
      %v891 = vadd.f32 %v806, %v890
      %v892 = vpop.f32.mrb[0].mxu0
      %v893 = vpop.f32.mrb[0].mxu0
      %v894 = vadd.f32 %v806, %v893
      %v895 = vpop.f32.mrb[0].mxu0
      %896 = vmatprep.mubr.bf16.mxu0 0
      %897 = vmatmul.mubr.bf16.gmra.mrb[0].mxu0 %v778
      %v898 = vpop.f32.mrb[0].mxu0
      %v899 = vadd.f32 %v806, %v898
      %v900 = vpop.f32.mrb[0].mxu0
      %v901 = vpop.f32.mrb[0].mxu0
      %v902 = vadd.f32 %v806, %v901
      %v903 = vpop.f32.mrb[0].mxu0
      %904 = vmatprep.mubr.bf16.mxu0 0
      %905 = vmatmul.mubr.bf16.gmra.mrb[0].mxu0 %v779
      %v906 = vpop.f32.mrb[0].mxu0
      %v907 = vadd.f32 %v806, %v906
      %v908 = vpop.f32.mrb[0].mxu0
      %v909 = vpop.f32.mrb[0].mxu0
      %v910 = vadd.f32 %v806, %v909
      %v911 = vpop.f32.mrb[0].mxu0
      %912 = vmatprep.mubr.bf16.mxu0 0
      %913 = vmatmul.mubr.bf16.gmra.mrb[0].mxu0 %v780
      %v914 = vpop.f32.mrb[0].mxu0
      %v915 = vadd.f32 %v806, %v914
      %v916 = vpop.f32.mrb[0].mxu0
      %v917 = vpop.f32.mrb[0].mxu0
      %v918 = vadd.f32 %v806, %v917
      %v919 = vpop.f32.mrb[0].mxu0
      %920 = vmatprep.mubr.bf16.mxu0 0
      %921 = vmatmul.mubr.bf16.gmra.mrb[0].mxu0 %v781
      %v922 = vpop.f32.mrb[0].mxu0
      %v923 = vadd.f32 %v806, %v922
      %v924 = vpop.f32.mrb[0].mxu0
      %v925 = vpop.f32.mrb[0].mxu0
      %v926 = vadd.f32 %v806, %v925
      %v927 = vpop.f32.mrb[0].mxu0
      %928 = vmatprep.mubr.bf16.mxu0 0
      %929 = vmatmul.mubr.bf16.gmra.mrb[0].mxu0 %v782
      %v930 = vpop.f32.mrb[0].mxu0
      %v931 = vadd.f32 %v806, %v930
      %v932 = vpop.f32.mrb[0].mxu0
      %v933 = vpop.f32.mrb[0].mxu0
      %v934 = vadd.f32 %v806, %v933
      %v935 = vpop.f32.mrb[0].mxu0
      %936 = vmatprep.mubr.bf16.mxu0 0
      %937 = vmatmul.mubr.bf16.gmra.mrb[0].mxu0 %v783
      %v938 = vpop.f32.mrb[0].mxu0
      %v939 = vadd.f32 %v806, %v938
      %v940 = vpop.f32.mrb[0].mxu0
      %v941 = vpop.f32.mrb[0].mxu0
      %v942 = vadd.f32 %v806, %v941
      %v943 = vpop.f32.mrb[0].mxu0
      %944 = vmatprep.mubr.bf16.mxu0 0
      %945 = vmatmul.mubr.bf16.gmra.mrb[0].mxu0 %v784
      %v946 = vpop.f32.mrb[0].mxu0
      %v947 = vadd.f32 %v806, %v946
      %v948 = vpop.f32.mrb[0].mxu0
      %v949 = vpop.f32.mrb[0].mxu0
      %v950 = vadd.f32 %v806, %v949
      %v951 = vpop.f32.mrb[0].mxu0
      %952 = vdwg.mxu0
      %v953 = vmax.f32 %v891, 0.0
      %v954 = vmax.f32 %v894, 0.0
      %v955 = vmax.f32 %v899, 0.0
      %v956 = vmax.f32 %v902, 0.0
      %v957 = vmax.f32 %v907, 0.0
      %v958 = vmax.f32 %v910, 0.0
      %v959 = vmax.f32 %v915, 0.0
      %v960 = vmax.f32 %v918, 0.0
      %v961 = vmax.f32 %v923, 0.0
      %v962 = vmax.f32 %v926, 0.0
      %v963 = vmax.f32 %v931, 0.0
      %v964 = vmax.f32 %v934, 0.0
      %v965 = vmax.f32 %v939, 0.0
      %v966 = vmax.f32 %v942, 0.0
      %v967 = vmax.f32 %v947, 0.0
      %v968 = vmax.f32 %v950, 0.0
      %v969 = vpack.c.bf16 %v954, %v953
      %v970 = vpack.c.bf16 %v956, %v955
      %v971 = vpack.c.bf16 %v958, %v957
      %v972 = vpack.c.bf16 %v960, %v959
      %v973 = vpack.c.bf16 %v962, %v961
      %v974 = vpack.c.bf16 %v964, %v963
      %v975 = vpack.c.bf16 %v966, %v965
      %v976 = vpack.c.bf16 %v968, %v967
      %v977 = vld [vmem:[%s6] sm:$0xf]
      %v978 = vld [vmem:[%s6 + $0x4] sm:$0xf]
      %v979 = vld [vmem:[%s6 + $0x8] sm:$0xf]
      %v980 = vld [vmem:[%s6 + $0xc] sm:$0xf]
      %v981 = vld [vmem:[%s6 + $0x10] sm:$0xf]
      %v982 = vld [vmem:[%s6 + $0x14] sm:$0xf]
      %v983 = vld [vmem:[%s6 + $0x18] sm:$0xf]
      %v984 = vld [vmem:[%s6 + $0x1c] sm:$0xf]
      %v985 = vld [vmem:[%s6 + $0x20] sm:$0xf]
      %v986 = vld [vmem:[%s6 + $0x24] sm:$0xf]
      %v987 = vld [vmem:[%s6 + $0x28] sm:$0xf]
      %v988 = vld [vmem:[%s6 + $0x2c] sm:$0xf]
      %v989 = vld [vmem:[%s6 + $0x30] sm:$0xf]
      %v990 = vld [vmem:[%s6 + $0x34] sm:$0xf]
      %v991 = vld [vmem:[%s6 + $0x38] sm:$0xf]
      %v992 = vld [vmem:[%s6 + $0x3c] sm:$0xf]
      %v993 = vld [vmem:[%s7] sm:$0x1]
      %v995 = vlaneseq
      %v996 = vshrl.u32 %v995, 7
      %v997 = vsub.s32 0, %v996
      %v998 = vrot.slane %v993, %v997
      %v1016 = vunpack.c.l.b16 %v977
      %v1017 = vunpack.c.l.b16 %v978
      %v1018 = vunpack.c.l.b16 %v979
      %v1019 = vunpack.c.l.b16 %v980
      %v1020 = vunpack.c.l.b16 %v981
      %v1021 = vunpack.c.l.b16 %v982
      %v1022 = vunpack.c.l.b16 %v983
      %v1023 = vunpack.c.l.b16 %v984
      %v1024 = vunpack.c.l.b16 %v985
      %v1025 = vunpack.c.l.b16 %v986
      %v1026 = vunpack.c.l.b16 %v987
      %v1027 = vunpack.c.l.b16 %v988
      %v1028 = vunpack.c.l.b16 %v989
      %v1029 = vunpack.c.l.b16 %v990
      %v1030 = vunpack.c.l.b16 %v991
      %v1031 = vunpack.c.l.b16 %v992
      %v1032 = vpack.c.b16 %v1017, %v1016
      %v1033 = vpack.c.b16 %v1019, %v1018
      %v1034 = vpack.c.b16 %v1021, %v1020
      %v1035 = vpack.c.b16 %v1023, %v1022
      %v1036 = vpack.c.b16 %v1025, %v1024
      %v1037 = vpack.c.b16 %v1027, %v1026
      %v1038 = vpack.c.b16 %v1029, %v1028
      %v1039 = vpack.c.b16 %v1031, %v1030
      %1048 = vmatprep.subr.bf16.mxu0 0
      %1049 = vmatpush1.bf16.msra.mxu0 %v1032
      %1050 = vmatprep.subr.bf16.mxu0 0
      %1051 = vmatpush1.bf16.msra.mxu0 %v1033
      %1052 = vmatprep.subr.bf16.mxu0 0
      %1053 = vmatpush1.bf16.msra.mxu0 %v1034
      %1054 = vmatprep.subr.bf16.mxu0 0
      %1055 = vmatpush1.bf16.msra.mxu0 %v1035
      %1056 = vmatprep.subr.bf16.mxu0 0
      %1057 = vmatpush1.bf16.msra.mxu0 %v1036
      %1058 = vmatprep.subr.bf16.mxu0 0
      %1059 = vmatpush1.bf16.msra.mxu0 %v1037
      %1060 = vmatprep.subr.bf16.mxu0 0
      %1061 = vmatpush1.bf16.msra.mxu0 %v1038
      %1062 = vmatprep.subr.bf16.mxu0 0
      %1063 = vmatpush1.bf16.msra.mxu0 %v1039
      %1064 = vmatprep.subr.bf16.mxu0 0
      %1065 = vmatpush1.bf16.msra.mxu0 0
      %1066 = vmatprep.subr.bf16.mxu0 0
      %1067 = vmatpush1.bf16.msra.mxu0 0
      %1068 = vmatprep.subr.bf16.mxu0 0
      %1069 = vmatpush1.bf16.msra.mxu0 0
      %1070 = vmatprep.subr.bf16.mxu0 0
      %1071 = vmatpush1.bf16.msra.mxu0 0
      %1072 = vmatprep.subr.bf16.mxu0 0
      %1073 = vmatpush1.bf16.msra.mxu0 0
      %1074 = vmatprep.subr.bf16.mxu0 0
      %1075 = vmatpush1.bf16.msra.mxu0 0
      %1076 = vmatprep.subr.bf16.mxu0 0
      %1077 = vmatpush1.bf16.msra.mxu0 0
      %1078 = vmatprep.subr.bf16.mxu0 0
      %1079 = vmatpush1.bf16.msra.mxu0 0
      %1080 = vmatprep.mubr.bf16.mxu0 0
      %1081 = vmatmul.mubr.bf16.gmra.mrb[0].mxu0 %v969
      %v1082 = vpop.f32.mrb[0].mxu0
      %v1083 = vadd.f32 %v998, %v1082
      %v1084 = vpop.f32.mrb[0].mxu0
      %v1085 = vpop.f32.mrb[0].mxu0
      %v1086 = vadd.f32 %v998, %v1085
      %v1087 = vpop.f32.mrb[0].mxu0
      %1088 = vmatprep.mubr.bf16.mxu0 0
      %1089 = vmatmul.mubr.bf16.gmra.mrb[0].mxu0 %v970
      %v1090 = vpop.f32.mrb[0].mxu0
      %v1091 = vadd.f32 %v998, %v1090
      %v1092 = vpop.f32.mrb[0].mxu0
      %v1093 = vpop.f32.mrb[0].mxu0
      %v1094 = vadd.f32 %v998, %v1093
      %v1095 = vpop.f32.mrb[0].mxu0
      %1096 = vmatprep.mubr.bf16.mxu0 0
      %1097 = vmatmul.mubr.bf16.gmra.mrb[0].mxu0 %v971
      %v1098 = vpop.f32.mrb[0].mxu0
      %v1099 = vadd.f32 %v998, %v1098
      %v1100 = vpop.f32.mrb[0].mxu0
      %v1101 = vpop.f32.mrb[0].mxu0
      %v1102 = vadd.f32 %v998, %v1101
      %v1103 = vpop.f32.mrb[0].mxu0
      %1104 = vmatprep.mubr.bf16.mxu0 0
      %1105 = vmatmul.mubr.bf16.gmra.mrb[0].mxu0 %v972
      %v1106 = vpop.f32.mrb[0].mxu0
      %v1107 = vadd.f32 %v998, %v1106
      %v1108 = vpop.f32.mrb[0].mxu0
      %v1109 = vpop.f32.mrb[0].mxu0
      %v1110 = vadd.f32 %v998, %v1109
      %v1111 = vpop.f32.mrb[0].mxu0
      %1112 = vmatprep.mubr.bf16.mxu0 0
      %1113 = vmatmul.mubr.bf16.gmra.mrb[0].mxu0 %v973
      %v1114 = vpop.f32.mrb[0].mxu0
      %v1115 = vadd.f32 %v998, %v1114
      %v1116 = vpop.f32.mrb[0].mxu0
      %v1117 = vpop.f32.mrb[0].mxu0
      %v1118 = vadd.f32 %v998, %v1117
      %v1119 = vpop.f32.mrb[0].mxu0
      %1120 = vmatprep.mubr.bf16.mxu0 0
      %1121 = vmatmul.mubr.bf16.gmra.mrb[0].mxu0 %v974
      %v1122 = vpop.f32.mrb[0].mxu0
      %v1123 = vadd.f32 %v998, %v1122
      %v1124 = vpop.f32.mrb[0].mxu0
      %v1125 = vpop.f32.mrb[0].mxu0
      %v1126 = vadd.f32 %v998, %v1125
      %v1127 = vpop.f32.mrb[0].mxu0
      %1128 = vmatprep.mubr.bf16.mxu0 0
      %1129 = vmatmul.mubr.bf16.gmra.mrb[0].mxu0 %v975
      %v1130 = vpop.f32.mrb[0].mxu0
      %v1131 = vadd.f32 %v998, %v1130
      %v1132 = vpop.f32.mrb[0].mxu0
      %v1133 = vpop.f32.mrb[0].mxu0
      %v1134 = vadd.f32 %v998, %v1133
      %v1135 = vpop.f32.mrb[0].mxu0
      %1136 = vmatprep.mubr.bf16.mxu0 0
      %1137 = vmatmul.mubr.bf16.gmra.mrb[0].mxu0 %v976
      %v1138 = vpop.f32.mrb[0].mxu0
      %v1139 = vadd.f32 %v998, %v1138
      %v1140 = vpop.f32.mrb[0].mxu0
      %v1141 = vpop.f32.mrb[0].mxu0
      %v1142 = vadd.f32 %v998, %v1141
      %v1143 = vpop.f32.mrb[0].mxu0
      %1144 = vdwg.mxu0
      %v1145 = vtanh.pop %v1083
      %v1146 = vtanh.pop %v1086
      %v1147 = vtanh.pop %v1091
      %v1148 = vtanh.pop %v1094
      %v1149 = vtanh.pop %v1099
      %v1150 = vtanh.pop %v1102
      %v1151 = vtanh.pop %v1107
      %v1152 = vtanh.pop %v1110
      %v1153 = vtanh.pop %v1115
      %v1154 = vtanh.pop %v1118
      %v1155 = vtanh.pop %v1123
      %v1156 = vtanh.pop %v1126
      %v1157 = vtanh.pop %v1131
      %v1158 = vtanh.pop %v1134
      %v1159 = vtanh.pop %v1139
      %v1160 = vtanh.pop %v1142
      %1161 = vst [vmem:[%s307] sm:$0xff] %v1145
      %1162 = vst [vmem:[%s307 + $0x8] sm:$0xff] %v1146
      %1163 = vst [vmem:[%s307 + $0x10] sm:$0xff] %v1147
      %1164 = vst [vmem:[%s307 + $0x18] sm:$0xff] %v1148
      %1165 = vst [vmem:[%s307 + $0x20] sm:$0xff] %v1149
      %1166 = vst [vmem:[%s307 + $0x28] sm:$0xff] %v1150
      %1167 = vst [vmem:[%s307 + $0x30] sm:$0xff] %v1151
      %1168 = vst [vmem:[%s307 + $0x38] sm:$0xff] %v1152
      %1169 = vst [vmem:[%s307 + $0x40] sm:$0xff] %v1153
      %1170 = vst [vmem:[%s307 + $0x48] sm:$0xff] %v1154
      %1171 = vst [vmem:[%s307 + $0x50] sm:$0xff] %v1155
      %1172 = vst [vmem:[%s307 + $0x58] sm:$0xff] %v1156
      %1173 = vst [vmem:[%s307 + $0x60] sm:$0xff] %v1157
      %1174 = vst [vmem:[%s307 + $0x68] sm:$0xff] %v1158
      %1175 = vst [vmem:[%s307 + $0x70] sm:$0xff] %v1159
      %1176 = vst [vmem:[%s307 + $0x78] sm:$0xff] %v1160
      %s1177 = smul.u32 16, %s19
      %p1178 = scmp.lt.s32.totalorder %s1177, 31
      %s1179 = scalar_select %p1178, %s1177, 31
      %s1180 = smul.addr %s1179, 8
      %s1181 = scalar_lea.vmem %s8, %s1180
      // Predicated region
      $region53: #{_device_forward.1} parent=51 // pred_check
        %p1182 = pneg %p210
      $region54: #{_device_forward.1} parent=51 // pred_check_branch
        %1184 = sbr.rel (%p1182) target = $region56
      $region55: #{_device_forward.1} parent=51 // pred_region
        %s1185 = smul.u32 16, %s19
      $region56: #{_device_forward.1} parent=51 // pred_fallthru
        _
    $region52: #{_device_forward.1} parent=5 // pred_fallthru
      _
    %p1186 = scmp.le.s32.totalorder 2, %s14
    // Predicated region
    $region57: #{_device_forward.1} parent=5 // pred_check
      %p1187 = pneg %p1186
    $region58: #{_device_forward.1} parent=5 // pred_check_branch
      %1189 = sbr.rel (%p1187) target = $region60
    $region59: #{_device_forward.1} parent=5 // pred_region
      %s1190 = ssub.s32 %s14, 2
      // Predicated region
      $region61: #{_device_forward.1} parent=59 // pred_check
        %p1191 = pneg %p216
      $region62: #{_device_forward.1} parent=59 // pred_check_branch
        %1193 = sbr.rel (%p1191) target = $region64
      $region63: #{_device_forward.1} parent=59 // pred_region
        %s1194 = smul.u32 16, %s20
        %p1195 = scmp.lt.s32.totalorder %s1194, 31
        %s1196 = scalar_select %p1195, %s1194, 31
        %s1197 = smul.addr %s1196, 8
        %s1198 = scalar_lea.vmem %s8, %s1197
      $region64: #{_device_forward.1} parent=59 // pred_fallthru
        _
    $region60: #{_device_forward.1} parent=5 // pred_fallthru
      _
  $region6: #{_device_forward.1} parent=0 // loop_footer
    %s18 = sadd.s32 1, %s14
  $region7: #{_device_forward.1} parent=0 // loop_footer_branch
    %13 = sbr.rel target = $region3
  $region8: #{_device_forward.1} parent=0 // loop_exit
    _

</llo_original>
